<compile_context>
chip_gen: v7x
topology: tpu7x:2x2x1
jax: 0.10.0
libtpu: 0.0.40
codegen_flags: <defaults>
</compile_context>

<pallas_src>
import functools

import jax
import jax.numpy as jnp
from jax.experimental import pallas as pl
from jax.experimental.pallas import tpu as pltpu


_VMEM_LIMIT = 48 << 20      # scoped VMEM limit (<= v7x's 64 MiB physical VMEM)
_FUSED_BUDGET = 24 << 20    # 2x(in) + 2x(out) f32 slabs for the fused path


def _round_up(x, m):
    return ((x + m - 1) // m) * m


def _pick_tile(padded_total, base, max_tile):
    """Largest multiple of `base` that divides `padded_total` and is <= max_tile."""
    units = padded_total // base
    max_units = max(1, max_tile // base)
    for d in range(min(units, max_units), 0, -1):
        if units % d == 0:
            return d * base
    return base


# ---------------------------------------------------------------------------
# Fused single-pass kernel: one batch's full (C, HW) slab per grid step.
# ---------------------------------------------------------------------------
def _grn_fused_kernel(gamma_ref, beta_ref, x_ref, o_ref, *, eps):
    x = x_ref[0].astype(jnp.float32)                        # (C, HW)
    ssq = jnp.sum(x * x, axis=-1, keepdims=True)            # (C, 1)
    gx = jnp.sqrt(ssq)                                      # per-channel L2 norm
    nx = gx / (jnp.mean(gx, axis=0, keepdims=True) + eps)   # (C, 1)
    scale = 1.0 + gamma_ref[...] * nx                       # residual folded in
    o_ref[0] = (x * scale + beta_ref[...]).astype(o_ref.dtype)


def _grn_fused(x, gamma, beta, eps):
    B, C, H, W = x.shape
    HW = H * W
    x3 = x.reshape(B, C, HW)                    # contiguous reshape: free
    gamma2 = gamma.reshape(C, 1).astype(jnp.float32)
    beta2 = beta.reshape(C, 1).astype(jnp.float32)

    # TODO(synk): if B == 1, split HW (or C) into a leading parallel axis so
    # both v7x TensorCores are used; with B >= 2 the batch axis shards fine.
    out = pl.pallas_call(
        functools.partial(_grn_fused_kernel, eps=eps),
        out_shape=jax.ShapeDtypeStruct((B, C, HW), x.dtype),
        grid_spec=pltpu.PrefetchScalarGridSpec(
            num_scalar_prefetch=0,
            grid=(B,),
            in_specs=[
                pl.BlockSpec((C, 1), lambda b: (0, 0)),         # gamma (f32)
                pl.BlockSpec((C, 1), lambda b: (0, 0)),         # beta  (f32)
                pl.BlockSpec((1, C, HW), lambda b: (b, 0, 0)),  # x slab
            ],
            out_specs=pl.BlockSpec((1, C, HW), lambda b: (b, 0, 0)),
        ),
        compiler_params=pltpu.CompilerParams(
            dimension_semantics=("parallel",),
            vmem_limit_bytes=_VMEM_LIMIT),
    )(gamma2, beta2, x3)
    return out.reshape(B, C, H, W)


# ---------------------------------------------------------------------------
# Fallback two-phase path (slab too large for VMEM): tiled reduce + apply.
# ---------------------------------------------------------------------------
def _ssq_kernel(x_ref, ssq_ref, acc_ref):
    # acc_ref: (t_r, 128) lane-partial sums, accumulated with pure VPU adds.
    @pl.when(pl.program_id(1) == 0)
    def _():
        acc_ref[...] = jnp.zeros_like(acc_ref)

    x = x_ref[...].astype(jnp.float32)
    t_hw = x.shape[1]
    acc = acc_ref[...]
    for k in range(t_hw // 128):               # static unroll, 128-lane chunks
        c = x[:, k * 128:(k + 1) * 128]
        acc = acc + c * c
    acc_ref[...] = acc

    # Single cross-lane reduce + narrow (t_r, 1) store, once per row tile.
    @pl.when(pl.program_id(1) == pl.num_programs(1) - 1)
    def _():
        ssq_ref[...] = jnp.sum(acc_ref[...], axis=1, keepdims=True)


def _apply_kernel(x_ref, scale_ref, bias_ref, o_ref):
    x = x_ref[...].astype(jnp.float32)
    o_ref[...] = (x * scale_ref[...] + bias_ref[...]).astype(o_ref.dtype)


def _grn_two_phase(x, gamma, beta, eps):
    B, C, H, W = x.shape
    BC, HW = B * C, H * W
    xf = x.reshape(BC, HW)

    # Minimal padding only (8 sublanes / 128 lanes), with tiles that exactly
    # divide the padded extents -- no round-up-to-max-tile waste.
    R_pad = _round_up(BC, 8)
    HW_pad = _round_up(HW, 128)
    padded = (R_pad != BC) or (HW_pad != HW)
    if padded:
        # Zero padding contributes 0 to sum(x^2); padded rows are sliced off.
        xf = jnp.pad(xf, ((0, R_pad - BC), (0, HW_pad - HW)))

    t_r = _pick_tile(R_pad, 8, 512)
    t_hw = _pick_tile(HW_pad, 128, 2048)
    grid = (R_pad // t_r, HW_pad // t_hw)

    ssq = pl.pallas_call(
        _ssq_kernel,
        out_shape=jax.ShapeDtypeStruct((R_pad, 1), jnp.float32),
        grid_spec=pltpu.PrefetchScalarGridSpec(
            num_scalar_prefetch=0,
            grid=grid,
            in_specs=[pl.BlockSpec((t_r, t_hw), lambda i, j: (i, j))],
            out_specs=pl.BlockSpec((t_r, 1), lambda i, j: (i, 0)),
            scratch_shapes=[pltpu.VMEM((t_r, 128), jnp.float32)]),
        compiler_params=pltpu.CompilerParams(
            dimension_semantics=("parallel", "arbitrary"),
            vmem_limit_bytes=_VMEM_LIMIT),
    )(xf)

    # Tiny O(B*C) normalization between the two kernels (plain JAX, f32).
    gx = jnp.sqrt(ssq[:BC, 0].reshape(B, C))
    nx = gx / (jnp.mean(gx, axis=1, keepdims=True) + eps)
    scale = (1.0 + gamma[None, :].astype(jnp.float32) * nx).reshape(BC, 1)
    bias = jnp.broadcast_to(beta[None, :].astype(jnp.float32),
                            (B, C)).reshape(BC, 1)
    if R_pad != BC:
        scale = jnp.pad(scale, ((0, R_pad - BC), (0, 0)))
        bias = jnp.pad(bias, ((0, R_pad - BC), (0, 0)))

    out = pl.pallas_call(
        _apply_kernel,
        out_shape=jax.ShapeDtypeStruct((R_pad, HW_pad), x.dtype),
        grid_spec=pltpu.PrefetchScalarGridSpec(
            num_scalar_prefetch=0,
            grid=grid,
            in_specs=[
                pl.BlockSpec((t_r, t_hw), lambda i, j: (i, j)),   # x
                pl.BlockSpec((t_r, 1), lambda i, j: (i, 0)),      # scale (f32)
                pl.BlockSpec((t_r, 1), lambda i, j: (i, 0)),      # bias  (f32)
            ],
            out_specs=pl.BlockSpec((t_r, t_hw), lambda i, j: (i, j)),
        ),
        compiler_params=pltpu.CompilerParams(
            dimension_semantics=("parallel", "parallel"),
            vmem_limit_bytes=_VMEM_LIMIT),
        # Reuse the padded temporary's HBM buffer for the output (P8).
        input_output_aliases={0: 0} if padded else {},
    )(xf, scale, bias)

    return out[:BC, :HW].reshape(B, C, H, W)


# ---------------------------------------------------------------------------
# Dispatch + reference
# ---------------------------------------------------------------------------
def grn_forward(x, gamma, beta, eps=1e-6):
    """x: (B, C, H, W). gamma, beta: (C,). Returns (B, C, H, W)."""
    _, C, H, W = x.shape
    # Fused path if 2x(input) + 2x(output) f32 slabs fit the VMEM budget.
    if 4 * C * H * W * 4 <= _FUSED_BUDGET:
        return _grn_fused(x, gamma, beta, eps)
    return _grn_two_phase(x, gamma, beta, eps)


def grn_reference(x, gamma, beta, eps=1e-6):
    """Pure-JAX reference mirroring the PyTorch GRN.forward."""
    xf = x.astype(jnp.float32)
    gx = jnp.sqrt(jnp.sum(xf * xf, axis=(2, 3), keepdims=True))      # (B,C,1,1)
    nx = gx / (jnp.mean(gx, axis=1, keepdims=True) + eps)
    out = (gamma[None, :, None, None] * (xf * nx)
           + beta[None, :, None, None] + xf)
    return out.astype(x.dtype)


if __name__ == "__main__":
    B, C, H, W = 2, 4, 16, 16

    key = jax.random.PRNGKey(0)
    kx, kg, kb = jax.random.split(key, 3)

    x = jax.random.normal(kx, (B, C, H, W), jnp.float32)
    # PyTorch initializes gamma/beta to zeros (forward would be identity+beta);
    # use random values so the normalization path is actually exercised.
    gamma = jax.random.normal(kg, (C,), jnp.float32)
    beta = jax.random.normal(kb, (C,), jnp.float32)

    ref = grn_reference(x, gamma, beta)

    out = grn_forward(x, gamma, beta)                 # fused single-pass path
    jax.block_until_ready(out)
    assert jnp.allclose(out, ref, atol=1e-5, rtol=1e-5), float(
        jnp.max(jnp.abs(out - ref)))

    out_fb = _grn_two_phase(x, gamma, beta, 1e-6)     # exercise fallback path
    jax.block_until_ready(out_fb)
    assert jnp.allclose(out_fb, ref, atol=1e-5, rtol=1e-5), float(
        jnp.max(jnp.abs(out_fb - ref)))

    print("KERNEL_OK")
</pallas_src>

<mosaic_0001>
module attributes {stable_mosaic.version = 11 : i64} {
  func.func @_grn_fused_kernel(%arg0: i32, %arg1: memref<4x1xf32, #tpu.memory_space<vmem>>, %arg2: memref<4x1xf32, #tpu.memory_space<vmem>>, %arg3: memref<1x4x256xf32, #tpu.memory_space<vmem>>, %arg4: memref<1x4x256xf32, #tpu.memory_space<vmem>>) attributes {dimension_semantics = [#tpu.dimension_semantics<parallel>], iteration_bounds = array<i64: 2>, scalar_prefetch = 0 : i64, scratch_operands = 0 : i64, tpu.core_type = #tpu.core_type<tc>, window_params = [{pipeline_mode = #tpu.pipeline_mode<synchronous>, transform_indices = @transform_0, window_bounds = array<i64: 4, 1>}, {pipeline_mode = #tpu.pipeline_mode<synchronous>, transform_indices = @transform_1, window_bounds = array<i64: 4, 1>}, {transform_indices = @transform_2, window_bounds = array<i64: 1, 4, 256>}, {transform_indices = @transform_3, window_bounds = array<i64: 1, 4, 256>}]} {
    %c0 = arith.constant 0 : index
    %c0_0 = arith.constant 0 : index
    %c0_1 = arith.constant 0 : index
    %0 = vector.load %arg3[%c0, %c0_0, %c0_1] : memref<1x4x256xf32, #tpu.memory_space<vmem>>, vector<1x4x256xf32>
    %1 = vector.shape_cast %0 : vector<1x4x256xf32> to vector<4x256xf32>
    %2 = arith.mulf %1, %1 : vector<4x256xf32>
    %cst = arith.constant dense<0.000000e+00> : vector<4xf32>
    %3 = vector.multi_reduction <add>, %2, %cst [1] : vector<4x256xf32> to vector<4xf32>
    %4 = vector.shape_cast %3 : vector<4xf32> to vector<4x1xf32>
    %5 = math.sqrt %4 : vector<4x1xf32>
    %cst_2 = arith.constant dense<0.000000e+00> : vector<1xf32>
    %6 = vector.multi_reduction <add>, %5, %cst_2 [0] : vector<4x1xf32> to vector<1xf32>
    %7 = vector.shape_cast %6 : vector<1xf32> to vector<1x1xf32>
    %cst_3 = arith.constant 4.000000e+00 : f32
    %8 = vector.broadcast %cst_3 : f32 to vector<1x1xf32>
    %9 = arith.divf %7, %8 : vector<1x1xf32>
    %cst_4 = arith.constant 9.99999997E-7 : f32
    %10 = vector.broadcast %cst_4 : f32 to vector<1x1xf32>
    %11 = arith.addf %9, %10 : vector<1x1xf32>
    %12 = vector.broadcast %11 : vector<1x1xf32> to vector<4x1xf32>
    %13 = arith.divf %5, %12 : vector<4x1xf32>
    %c0_5 = arith.constant 0 : index
    %c0_6 = arith.constant 0 : index
    %14 = vector.load %arg1[%c0_5, %c0_6] : memref<4x1xf32, #tpu.memory_space<vmem>>, vector<4x1xf32>
    %15 = arith.mulf %14, %13 : vector<4x1xf32>
    %cst_7 = arith.constant 1.000000e+00 : f32
    %16 = vector.broadcast %cst_7 : f32 to vector<4x1xf32>
    %17 = arith.addf %16, %15 : vector<4x1xf32>
    %18 = vector.broadcast %17 : vector<4x1xf32> to vector<4x256xf32>
    %19 = arith.mulf %1, %18 : vector<4x256xf32>
    %c0_8 = arith.constant 0 : index
    %c0_9 = arith.constant 0 : index
    %20 = vector.load %arg2[%c0_8, %c0_9] : memref<4x1xf32, #tpu.memory_space<vmem>>, vector<4x1xf32>
    %21 = vector.broadcast %20 : vector<4x1xf32> to vector<4x256xf32>
    %22 = arith.addf %19, %21 : vector<4x256xf32>
    %c0_10 = arith.constant 0 : index
    %c0_11 = arith.constant 0 : index
    %c0_12 = arith.constant 0 : index
    %23 = vector.load %arg4[%c0_10, %c0_11, %c0_12] : memref<1x4x256xf32, #tpu.memory_space<vmem>>, vector<1x4x256xf32>
    %24 = vector.shape_cast %23 : vector<1x4x256xf32> to vector<4x256xf32>
    %25 = vector.shape_cast %22 : vector<4x256xf32> to vector<1x4x256xf32>
    tpu.vector_store %arg4[%c0_10, %c0_11, %c0_12], %25 {strides = array<i32>} : memref<1x4x256xf32, #tpu.memory_space<vmem>>, vector<1x4x256xf32>,
    return
  }
  func.func @transform_0(%arg0: i32) -> (i32, i32) {
    %c0_i32 = arith.constant 0 : i32
    %c0_i32_0 = arith.constant 0 : i32
    %c0_i32_1 = arith.constant 0 : i32
    return %c0_i32, %c0_i32_0 : i32, i32
  }
  func.func @transform_1(%arg0: i32) -> (i32, i32) {
    %c0_i32 = arith.constant 0 : i32
    %c0_i32_0 = arith.constant 0 : i32
    %c0_i32_1 = arith.constant 0 : i32
    return %c0_i32, %c0_i32_0 : i32, i32
  }
  func.func @transform_2(%arg0: i32) -> (i32, i32, i32) {
    %c0_i32 = arith.constant 0 : i32
    %c0_i32_0 = arith.constant 0 : i32
    %c0_i32_1 = arith.constant 0 : i32
    return %arg0, %c0_i32, %c0_i32_0 : i32, i32, i32
  }
  func.func @transform_3(%arg0: i32) -> (i32, i32, i32) {
    %c0_i32 = arith.constant 0 : i32
    %c0_i32_0 = arith.constant 0 : i32
    %c0_i32_1 = arith.constant 0 : i32
    return %arg0, %c0_i32, %c0_i32_0 : i32, i32, i32
  }
}

</mosaic_0001>

<llo_original>
// kernel: tpu_custom_call.1
$region0: #{tpu_custom_call.1}
  #allocation0 [shape = 'u32[]', space=smem, size = 0x4, offset = 0x4, fixed_abs, tag = 'smem constant byte address 0x4 - core index']
  #allocation1 [shape = 'u32[144,128]{1,0:T(1,128)}', space=vmem, size = 0x12000, scoped, tag = 'internal scratch']
  %s0 = inlined_call_operand.vmem [shape: f32[4,1], index: 0, kind: input, shape index: {}]
  %s1 = inlined_call_operand.vmem [shape: f32[4,1], index: 1, kind: input, shape index: {}]
  %s2 = inlined_call_operand.vmem [shape: f32[2,4,256], index: 2, kind: input, shape index: {}]
  %s3 = inlined_call_operand.hbm [shape: f32[2,4,256], index: 3, kind: output, shape index: {}]
  %s4 = sld [smem:[#allocation0]]
  $region45: #{tpu_custom_call.1} parent=0
    _
  %s6 = ssub.s32 1, %s4
  %s7 = scalar_select 0, %s6, %s4
  $region1: #{tpu_custom_call.1} parent=0
    #allocation2 [shape = 'u8[8192]{0}', space=vmem, size = 0x2000, scoped, tag = 'output window, operand 0']
    #allocation3 [shape = 's32[2]{0}', space=sflag, size = 0x8, scoped, tag = 'scoped memory for tpu_custom_call.1']
    %8 = vsyncpa [#allocation3], 0
    %s9 = scalar_lea.sflag [#allocation3], 1
    %10 = vsyncpa %s9, 0
    loop: start=0, step=1, limit=4
    $region2: #{tpu_custom_call.1} parent=1 // loop_pre_header
      _
    $region3: #{tpu_custom_call.1} parent=1 // loop_header
      %s12 = sphi 0, %s16
      %p13 = scmp.ge.s32.totalorder %s12, 4
      %s20 = sphi 0, %s20
      %s22 = sphi 0, %s20
      %s23 = sphi 0, %s22
      %s37 = sphi 0, %s23
      %s41 = sphi 0, %s41
      %s43 = sphi 0, %s41
      %s44 = sphi 0, %s43
      %s58 = sphi 0, %s44
      %s64 = sphi 0, %s66
      %s67 = sphi 0, %s64
      %s68 = sphi 0, %s67
      %s84 = sphi 0, %s68
      %s90 = sphi 0, %s92
      %s93 = sphi 0, %s90
      %s94 = sphi 0, %s93
      %s110 = sphi 0, %s94
    $region4: #{tpu_custom_call.1} parent=1 // loop_header_branch
      %15 = sbr.rel (%p13) target = $region8
    $region5: #{tpu_custom_call.1} parent=1 // loop_body
      %s17 = ssub.s32 %s12, 1
      %s18 = ssub.s32 %s12, 2
      %s19 = sadd.s32 %s12, 1
      %s21 = sadd.s32 %s20, 1
      %p24 = scmp.eq.s32.totalorder %s12, 1
      %p25 = scmp.ne.s32.totalorder %s20, %s22
      %p26 = scmp.eq.s32.totalorder %s12, 0
      %p27 = por %p25, %p26
      %p28 = scmp.ne.s32.totalorder %s20, %s22
      %p29 = scmp.eq.s32.totalorder %s17, 1
      %p30 = por %p28, %p29
      %p31 = scmp.ne.s32.totalorder %s22, %s23
      %p32 = scmp.eq.s32.totalorder %s17, 0
      %p33 = por %p31, %p32
      %p34 = scmp.ne.s32.totalorder %s22, %s23
      %p35 = scmp.eq.s32.totalorder %s18, 1
      %p36 = por %p34, %p35
      %p38 = scmp.ne.s32.totalorder %s23, %s37
      %p39 = scmp.eq.s32.totalorder %s18, 0
      %p40 = por %p38, %p39
      %s42 = sadd.s32 %s41, 1
      %p45 = scmp.eq.s32.totalorder %s12, 1
      %p46 = scmp.ne.s32.totalorder %s41, %s43
      %p47 = scmp.eq.s32.totalorder %s12, 0
      %p48 = por %p46, %p47
      %p49 = scmp.ne.s32.totalorder %s41, %s43
      %p50 = scmp.eq.s32.totalorder %s17, 1
      %p51 = por %p49, %p50
      %p52 = scmp.ne.s32.totalorder %s43, %s44
      %p53 = scmp.eq.s32.totalorder %s17, 0
      %p54 = por %p52, %p53
      %p55 = scmp.ne.s32.totalorder %s43, %s44
      %p56 = scmp.eq.s32.totalorder %s18, 1
      %p57 = por %p55, %p56
      %p59 = scmp.ne.s32.totalorder %s44, %s58
      %p60 = scmp.eq.s32.totalorder %s18, 0
      %p61 = por %p59, %p60
      %s62 = ssub.s32 %s12, %s19
      %p63 = scmp.eq.s32.totalorder %s62, 0
      %s65 = sadd.s32 %s64, 1
      %s66 = scalar_select %p63, %s64, %s65
      %p69 = pneg %p63
      %p70 = scmp.eq.s32.totalorder %s12, 1
      %p71 = por %p69, %p70
      %p72 = scmp.ne.s32.totalorder %s64, %s67
      %p73 = scmp.eq.s32.totalorder %s12, 0
      %p74 = por %p72, %p73
      %p75 = scmp.ne.s32.totalorder %s64, %s67
      %p76 = scmp.eq.s32.totalorder %s17, 1
      %p77 = por %p75, %p76
      %p78 = scmp.ne.s32.totalorder %s67, %s68
      %p79 = scmp.eq.s32.totalorder %s17, 0
      %p80 = por %p78, %p79
      %p81 = scmp.ne.s32.totalorder %s67, %s68
      %p82 = scmp.eq.s32.totalorder %s18, 1
      %p83 = por %p81, %p82
      %p85 = scmp.ne.s32.totalorder %s68, %s84
      %p86 = scmp.eq.s32.totalorder %s18, 0
      %p87 = por %p85, %p86
      %s88 = ssub.s32 %s12, %s19
      %p89 = scmp.eq.s32.totalorder %s88, 0
      %s91 = sadd.s32 %s90, 1
      %s92 = scalar_select %p89, %s90, %s91
      %p95 = pneg %p89
      %p96 = scmp.eq.s32.totalorder %s12, 1
      %p97 = por %p95, %p96
      %p98 = scmp.ne.s32.totalorder %s90, %s93
      %p99 = scmp.eq.s32.totalorder %s12, 0
      %p100 = por %p98, %p99
      %p101 = scmp.ne.s32.totalorder %s90, %s93
      %p102 = scmp.eq.s32.totalorder %s17, 1
      %p103 = por %p101, %p102
      %p104 = scmp.ne.s32.totalorder %s93, %s94
      %p105 = scmp.eq.s32.totalorder %s17, 0
      %p106 = por %p104, %p105
      %p107 = scmp.ne.s32.totalorder %s93, %s94
      %p108 = scmp.eq.s32.totalorder %s18, 1
      %p109 = por %p107, %p108
      %p111 = scmp.ne.s32.totalorder %s94, %s110
      %p112 = scmp.eq.s32.totalorder %s18, 0
      %p113 = por %p111, %p112
      %p114 = scmp.le.s32.totalorder 1, %s12
      %p115 = scmp.lt.s32.totalorder %s12, 3
      %p116 = pnand %p114, %p115
      %p117 = pneg %p116
      // Predicated region
      $region9: #{tpu_custom_call.1} parent=5 // pred_check
        _
      $region10: #{tpu_custom_call.1} parent=5 // pred_check_branch
        %119 = sbr.rel (%p116) target = $region12
      $region11: #{tpu_custom_call.1} parent=5 // pred_region
        %s120 = ssub.s32 %s12, 1
        // Predicated region
        $region13: #{tpu_custom_call.1} parent=11 // pred_check
          %p121 = pneg %p33
        $region14: #{tpu_custom_call.1} parent=11 // pred_check_branch
          %123 = sbr.rel (%p121) target = $region16
        $region15: #{tpu_custom_call.1} parent=11 // pred_region
          _
        $region16: #{tpu_custom_call.1} parent=11 // pred_fallthru
          _
        // Predicated region
        $region17: #{tpu_custom_call.1} parent=11 // pred_check
          %p124 = pneg %p54
        $region18: #{tpu_custom_call.1} parent=11 // pred_check_branch
          %126 = sbr.rel (%p124) target = $region20
        $region19: #{tpu_custom_call.1} parent=11 // pred_region
          _
        $region20: #{tpu_custom_call.1} parent=11 // pred_fallthru
          _
      $region12: #{tpu_custom_call.1} parent=5 // pred_fallthru
        _
      %p127 = scmp.lt.s32.totalorder %s12, 2
      // Predicated region
      $region21: #{tpu_custom_call.1} parent=5 // pred_check
        %p128 = pneg %p127
      $region22: #{tpu_custom_call.1} parent=5 // pred_check_branch
        %130 = sbr.rel (%p128) target = $region24
      $region23: #{tpu_custom_call.1} parent=5 // pred_region
        // Predicated region
        $region25: #{tpu_custom_call.1} parent=23 // pred_check
          %p131 = pneg %p74
        $region26: #{tpu_custom_call.1} parent=23 // pred_check_branch
          %133 = sbr.rel (%p131) target = $region28
        $region27: #{tpu_custom_call.1} parent=23 // pred_region
          %p134 = scmp.lt.s32.totalorder %s12, 1
          %s135 = scalar_select %p134, %s12, 1
          %s136 = smul.addr %s135, 2
          %s137 = smul.addr %s136, 4
          %s138 = scalar_lea.vmem %s2, %s137
        $region28: #{tpu_custom_call.1} parent=23 // pred_fallthru
          _
      $region24: #{tpu_custom_call.1} parent=5 // pred_fallthru
        _
      %p139 = scmp.le.s32.totalorder 1, %s12
      %p140 = scmp.lt.s32.totalorder %s12, 3
      %p141 = pnand %p139, %p140
      %p142 = pneg %p141
      // Predicated region
      $region29: #{tpu_custom_call.1} parent=5 // pred_check
        _
      $region30: #{tpu_custom_call.1} parent=5 // pred_check_branch
        %144 = sbr.rel (%p141) target = $region32
      $region31: #{tpu_custom_call.1} parent=5 // pred_region
        %s145 = ssub.s32 %s12, 1
        %p146 = pneg %p33
        %p147 = pneg %p30
        %p148 = pneg %p54
        %p149 = pneg %p51
        %p150 = scmp.lt.s32.totalorder %s17, 1
        %s151 = scalar_select %p150, %s17, 1
        %s152 = smul.addr %s151, 2
        %s153 = smul.addr %s152, 4
        %s154 = scalar_lea.vmem %s2, %s153
        %p155 = pneg %p80
        %p156 = pneg %p77
        %p157 = pneg %p106
        %p158 = pneg %p103
        %s159 = sand.u32 %s93, 1
        %s160 = scalar_lea.sflag [#allocation3], %s159
        %s161 = sand.u32 %s93, 1
        %s162 = smul.addr %s161, 8
        %s163 = scalar_lea.vmem [#allocation2], %s162
        %p164 = scmp.lt.s32.totalorder %s17, 1
        %s165 = scalar_select %p164, %s17, 1
        %s166 = smul.addr %s165, 2
        %s167 = smul.addr %s166, 4
        %s168 = scalar_lea.vmem %s2, %s167
        %v169 = vld [vmem:[%s168] sm:$0xff]
        %v170 = vmul.f32 %v169, %v169
        %v172 = vcombine.high %v170, %v170
        %vm174 = vcmask 1043456
        %v175 = vsel %vm174, %v170, 0.0
        %v176 = vsel %vm174, %v172, 0.0
        %v177 = vadd.f32 %v175, %v176
        %178 = vadd.xlane.f32.xlu0 %v177
        %v179 = vpop.xlane.xlu0 %178
        %v180 = vrsqrt.pop %v179
        %v181 = vmul.f32 %v179, %v180
        %vm182 = vcmp.eq.f32.partialorder %v179, inf
        %v183 = vsel %vm182, %v179, %v181
        %vm184 = vcmp.eq.f32.partialorder %v179, 0.0
        %v185 = vand.u32 %v179, 2147483648
        %v186 = vsel %vm184, %v185, %v183
        %v187 = vsel %vm174, %v186, 0.0
        %v188 = vrot.slane %v187, 4
        %v189 = vadd.f32 %v187, %v188
        %v190 = vrot.slane %v189, 2
        %v191 = vadd.f32 %v189, %v190
        %v192 = vrot.slane %v191, 1
        %v193 = vadd.f32 %v191, %v192
        %v194 = vrcp.pop 4.0
        %v195 = vmul.f32 %v193, %v194
        %v196 = vadd.f32 %v195, 1e-06
        %v197 = vrcp.pop %v196
        %v198 = vmul.f32 %v186, %v197
        %v199 = vld [vmem:[%s0] sm:$0xf]
        %v200 = vmul.f32 %v199, %v198
        %v201 = vadd.f32 %v200, 1.0
        %203 = vset.pattern.permute.xlu0 0
        %204 = vperm.xlu0 %203, %v201
        %v205 = vpop.permute.xlu0 %204
        %v207 = vunpack.c.l.s4 839922192
        %v208 = vunpack.c.0.s8 %v207
        %v209 = vlaneseq
        %v210 = vshrl.u32 %v209, 7
        %v211 = vsub.s32 %v208, %v210
        %v212 = vrot.slane %v205, %v211
        %v214 = vmul.f32 %v169, %v212
        %v215 = vld [vmem:[%s1] sm:$0xf]
        %217 = vset.pattern.permute.xlu0 0
        %218 = vperm.xlu0 %217, %v215
        %v219 = vpop.permute.xlu0 %218
        %v221 = vunpack.c.l.s4 839922192
        %v222 = vunpack.c.0.s8 %v221
        %v223 = vlaneseq
        %v224 = vshrl.u32 %v223, 7
        %v225 = vsub.s32 %v222, %v224
        %v226 = vrot.slane %v219, %v225
        %v228 = vadd.f32 %v214, %v226
        %229 = vst [vmem:[%s163] sm:$0xff] %v228
        %s230 = sand.u32 %s93, 1
        %s231 = scalar_lea.sflag [#allocation3], %s230
        %s232 = sand.u32 %s93, 1
        %s233 = smul.addr %s232, 8
        %s234 = scalar_lea.vmem [#allocation2], %s233
        // Predicated region
        $region33: #{tpu_custom_call.1} parent=31 // pred_check
          %p235 = pneg %p103
        $region34: #{tpu_custom_call.1} parent=31 // pred_check_branch
          %237 = sbr.rel (%p235) target = $region36
        $region35: #{tpu_custom_call.1} parent=31 // pred_region
          %s239 = ssub.s32 128, 128
          %240 = vsyncadd %s231, %s239
          %s241 = smul.addr %s17, 2
          %s242 = smul.addr %s241, 64
          %s243 = scalar_lea.hbm %s3, %s242
          %s245 = sshll.u32 %s234, 4
          %s246 = int_to_ptr.vmem [resolvable:$true] %s245
          %248 = dma.vmem_to_hbm [thread:$0]  %s246, 128, %s243, %s231
        $region36: #{tpu_custom_call.1} parent=31 // pred_fallthru
          _
      $region32: #{tpu_custom_call.1} parent=5 // pred_fallthru
        _
      %p249 = scmp.le.s32.totalorder 2, %s12
      // Predicated region
      $region37: #{tpu_custom_call.1} parent=5 // pred_check
        %p250 = pneg %p249
      $region38: #{tpu_custom_call.1} parent=5 // pred_check_branch
        %252 = sbr.rel (%p250) target = $region40
      $region39: #{tpu_custom_call.1} parent=5 // pred_region
        %s253 = ssub.s32 %s12, 2
        // Predicated region
        $region41: #{tpu_custom_call.1} parent=39 // pred_check
          %p254 = pneg %p109
        $region42: #{tpu_custom_call.1} parent=39 // pred_check_branch
          %256 = sbr.rel (%p254) target = $region44
        $region43: #{tpu_custom_call.1} parent=39 // pred_region
          %s257 = sand.u32 %s94, 1
          %s258 = scalar_lea.sflag [#allocation3], %s257
          %s259 = sand.u32 %s94, 1
          %s260 = smul.addr %s259, 8
          %s261 = scalar_lea.vmem [#allocation2], %s260
          %262 = dma.done %s258, 128
        $region44: #{tpu_custom_call.1} parent=39 // pred_fallthru
          _
      $region40: #{tpu_custom_call.1} parent=5 // pred_fallthru
        _
    $region6: #{tpu_custom_call.1} parent=1 // loop_footer
      %s16 = sadd.s32 1, %s12
    $region7: #{tpu_custom_call.1} parent=1 // loop_footer_branch
      %11 = sbr.rel target = $region3
    $region8: #{tpu_custom_call.1} parent=1 // loop_exit
      _
    %263 = vsyncpa [#allocation3], 1
    %s264 = scalar_lea.sflag [#allocation3], 1
    %265 = vsyncpa %s264, 1

</llo_original>
